<compile_context>
chip_gen: v6e
topology: v6e:2x2x1
jax: 0.10.0
libtpu: 0.0.40
codegen_flags: <defaults>
</compile_context>

<pallas_src>
import jax
import jax.numpy as jnp
from jax.experimental import pallas as pl
from jax.experimental.pallas import tpu as pltpu


def _cdiv(a, b):
    return -(-a // b)


def _round_up(a, m):
    return _cdiv(a, m) * m


def mlp_kernel(x_ref, w1_ref, b1_ref, w2_ref, b2_ref, w3_ref, b3_ref,
               w4_ref, b4_ref, o_ref):
    # fc1..fc3: bf16 MXU operands, f32 accumulation; bias-add / ReLU in f32.
    x = x_ref[...].astype(jnp.bfloat16)
    h = jnp.dot(x, w1_ref[...], preferred_element_type=jnp.float32)
    h = jnp.maximum(h + b1_ref[...], 0.0)

    h = jnp.dot(h.astype(jnp.bfloat16), w2_ref[...],
                preferred_element_type=jnp.float32)
    h = jnp.maximum(h + b2_ref[...], 0.0)

    h = jnp.dot(h.astype(jnp.bfloat16), w3_ref[...],
                preferred_element_type=jnp.float32)
    h = jnp.maximum(h + b3_ref[...], 0.0)

    # fc4 (out_features == 1): contract the 64-axis of w4 (1, 64) against the
    # 64-axis of h (rows, 64) in f32, producing a lane-dense (1, rows) row.
    out = jax.lax.dot_general(
        w4_ref[...], h,
        dimension_numbers=(((1,), (1,)), ((), ())),
        preferred_element_type=jnp.float32) + b4_ref[...]
    o_ref[...] = out.astype(o_ref.dtype)


def _cost_estimate(batch, input_size):
    flops = 2 * batch * (input_size * 256 + 256 * 128 + 128 * 64 + 64 * 1)
    weight_bytes = (2 * (input_size * 256 + 256 * 128 + 128 * 64)   # bf16
                    + 4 * (256 + 128 + 64 + 64 + 1))                # f32
    io_bytes = 4 * batch * (input_size + 1)
    return pl.CostEstimate(flops=flops, transcendentals=0,
                           bytes_accessed=weight_bytes + io_bytes)


def regression_model_forward(x, params, *, batch_tile=2048):
    """x: [batch, input_size] float32. params: dict of w1..w4, b1..b4 (f32)."""
    batch, in_features = x.shape
    bf16 = jnp.bfloat16
    # bf16 copies of the matmul weights are made once outside the kernel and
    # stay resident in VMEM (constant index_maps); biases / fc4 remain f32.
    weights = (params["w1"].astype(bf16), params["b1"],
               params["w2"].astype(bf16), params["b2"],
               params["w3"].astype(bf16), params["b3"],
               params["w4"], params["b4"])

    if batch <= batch_tile:
        # Small case: everything fits VMEM.  No grid, no pipeline -- every
        # operand is a whole-array VMEM ref, single kernel invocation.
        vmem = pl.BlockSpec(memory_space=pltpu.MemorySpace.VMEM)
        out = pl.pallas_call(
            mlp_kernel,
            out_shape=jax.ShapeDtypeStruct((1, batch), jnp.float32),
            in_specs=[vmem] * (1 + len(weights)),
            out_specs=vmem,
            cost_estimate=_cost_estimate(batch, in_features),
        )(x, *weights)
        return out.reshape(batch, 1)

    # Large batch: tile only the batch axis.  Even tile count (when >1) so the
    # "parallel" axis balances across v7x's two TensorCores; tb is kept
    # sublane-aligned (multiple of 8).
    n_tiles = _cdiv(batch, batch_tile)
    if n_tiles > 1 and n_tiles % 2:
        n_tiles += 1
    tb = _round_up(_cdiv(batch, n_tiles), 8)
    n_tiles = _cdiv(batch, tb)

    def resident(arr):
        # Whole-array block with a constant index_map -> stays in VMEM across
        # the whole grid (no per-step re-fetch).
        return pl.BlockSpec(arr.shape, lambda i: (0, 0))

    in_specs = [pl.BlockSpec((tb, in_features), lambda i: (i, 0))]
    in_specs += [resident(w) for w in weights]

    # No jnp.pad of x: the last input block is ragged; its garbage tail rows
    # only reach the output's pad region, which is sliced off below.
    out = pl.pallas_call(
        mlp_kernel,
        out_shape=jax.ShapeDtypeStruct((n_tiles, 1, tb), jnp.float32),
        grid=(n_tiles,),
        in_specs=in_specs,
        out_specs=pl.BlockSpec((None, 1, tb), lambda i: (i, 0, 0)),
        compiler_params=pltpu.CompilerParams(
            dimension_semantics=("parallel",)),
        cost_estimate=_cost_estimate(n_tiles * tb, in_features),
    )(x, *weights)
    return out.reshape(n_tiles * tb, 1)[:batch]


def init_params(input_size, key):
    """Deterministic init matching nn.Linear's uniform(-1/sqrt(fan_in), ...).

    w1..w3 stored as [in, out]; w4 stored as its (1, 64) row (same layout as
    nn.Linear(64, 1).weight); biases kept 2D for TPU-friendly broadcasting.
    """
    params = {}
    sizes = [(input_size, 256), (256, 128), (128, 64)]
    for i, (fan_in, fan_out) in enumerate(sizes, start=1):
        key, kw, kb = jax.random.split(key, 3)
        bound = 1.0 / jnp.sqrt(jnp.float32(fan_in))
        params[f"w{i}"] = jax.random.uniform(
            kw, (fan_in, fan_out), jnp.float32, -bound, bound)
        params[f"b{i}"] = jax.random.uniform(
            kb, (1, fan_out), jnp.float32, -bound, bound)
    key, kw, kb = jax.random.split(key, 3)
    bound = 1.0 / jnp.sqrt(jnp.float32(64))
    params["w4"] = jax.random.uniform(kw, (1, 64), jnp.float32, -bound, bound)
    params["b4"] = jax.random.uniform(kb, (1, 1), jnp.float32, -bound, bound)
    return params


def reference_forward(x, params, matmul_dtype=jnp.float32):
    """Pure-JAX reference. matmul_dtype=bfloat16 mimics the kernel's casts."""
    md = matmul_dtype
    h = jnp.maximum(
        jnp.dot(x.astype(md), params["w1"].astype(md),
                preferred_element_type=jnp.float32) + params["b1"], 0.0)
    h = jnp.maximum(
        jnp.dot(h.astype(md), params["w2"].astype(md),
                preferred_element_type=jnp.float32) + params["b2"], 0.0)
    h = jnp.maximum(
        jnp.dot(h.astype(md), params["w3"].astype(md),
                preferred_element_type=jnp.float32) + params["b3"], 0.0)
    return (jnp.dot(h, params["w4"].T, preferred_element_type=jnp.float32)
            + params["b4"])


if __name__ == "__main__":
    key = jax.random.PRNGKey(0)
    key, kx, kxb, kp = jax.random.split(key, 4)

    input_size = 32
    params = init_params(input_size, kp)

    # Small batch -> no-grid path (whole-array VMEM refs).
    batch = 8
    x_small = jax.random.normal(kx, (batch, input_size), jnp.float32)
    out_s = jax.block_until_ready(regression_model_forward(x_small, params))
    ref_s = reference_forward(x_small, params, matmul_dtype=jnp.bfloat16)
    assert out_s.shape == (batch, 1)
    assert jnp.allclose(out_s, ref_s, atol=2e-3, rtol=2e-3)

    # Larger, deliberately ragged batch -> grid path: 4 even tiles of 1032
    # rows, resident bf16 weights, "parallel" batch axis, no pad round-trip,
    # lane-dense (1, tb) output blocks.
    big_batch = 4100
    x_big = jax.random.normal(kxb, (big_batch, input_size), jnp.float32)
    out_b = jax.block_until_ready(regression_model_forward(x_big, params))
    ref_b_bf16 = reference_forward(x_big, params, matmul_dtype=jnp.bfloat16)
    ref_b_f32 = reference_forward(x_big, params, matmul_dtype=jnp.float32)
    assert out_b.shape == (big_batch, 1)
    # Exact-semantics check against a reference using the same bf16 operands.
    assert jnp.allclose(out_b, ref_b_bf16, atol=2e-3, rtol=2e-3)
    # Loose accuracy check against the full-f32 module semantics.
    assert jnp.allclose(out_b, ref_b_f32, atol=0.25, rtol=0.05)

    print("KERNEL_OK")
</pallas_src>

<mosaic_0001>
module attributes {stable_mosaic.version = 11 : i64} {
  func.func @mlp_kernel(%arg0: memref<8x32xf32, #tpu.memory_space<vmem>>, %arg1: memref<32x256xbf16, #tpu.memory_space<vmem>>, %arg2: memref<1x256xf32, #tpu.memory_space<vmem>>, %arg3: memref<256x128xbf16, #tpu.memory_space<vmem>>, %arg4: memref<1x128xf32, #tpu.memory_space<vmem>>, %arg5: memref<128x64xbf16, #tpu.memory_space<vmem>>, %arg6: memref<1x64xf32, #tpu.memory_space<vmem>>, %arg7: memref<1x64xf32, #tpu.memory_space<vmem>>, %arg8: memref<1x1xf32, #tpu.memory_space<vmem>>, %arg9: memref<1x8xf32, #tpu.memory_space<vmem>>) attributes {dimension_semantics = [], scalar_prefetch = 0 : i64, scratch_operands = 0 : i64, tpu.core_type = #tpu.core_type<tc>} {
    %c0 = arith.constant 0 : index
    %c0_0 = arith.constant 0 : index
    %0 = vector.load %arg0[%c0, %c0_0] : memref<8x32xf32, #tpu.memory_space<vmem>>, vector<8x32xf32>
    %1 = arith.truncf %0 : vector<8x32xf32> to vector<8x32xbf16>
    %c0_1 = arith.constant 0 : index
    %c0_2 = arith.constant 0 : index
    %2 = vector.load %arg1[%c0_1, %c0_2] : memref<32x256xbf16, #tpu.memory_space<vmem>>, vector<32x256xbf16>
    %cst = arith.constant dense<0.000000e+00> : vector<8x256xf32>
    %3 = tpu.matmul %1, %2, %cst {dimension_numbers = #tpu.dot_dimension_numbers<[1], [0], [0], [1], [0, 0, 1, 1], [], []>} : vector<8x32xbf16>, vector<32x256xbf16>, vector<8x256xf32> -> vector<8x256xf32>
    %c0_3 = arith.constant 0 : index
    %c0_4 = arith.constant 0 : index
    %4 = vector.load %arg2[%c0_3, %c0_4] : memref<1x256xf32, #tpu.memory_space<vmem>>, vector<1x256xf32>
    %5 = vector.broadcast %4 : vector<1x256xf32> to vector<8x256xf32>
    %6 = arith.addf %3, %5 : vector<8x256xf32>
    %cst_5 = arith.constant 0.000000e+00 : f32
    %7 = vector.broadcast %cst_5 : f32 to vector<8x256xf32>
    %8 = arith.maximumf %6, %7 : vector<8x256xf32>
    %9 = arith.truncf %8 : vector<8x256xf32> to vector<8x256xbf16>
    %c0_6 = arith.constant 0 : index
    %c0_7 = arith.constant 0 : index
    %10 = vector.load %arg3[%c0_6, %c0_7] : memref<256x128xbf16, #tpu.memory_space<vmem>>, vector<256x128xbf16>
    %cst_8 = arith.constant dense<0.000000e+00> : vector<8x128xf32>
    %11 = tpu.matmul %9, %10, %cst_8 {dimension_numbers = #tpu.dot_dimension_numbers<[1], [0], [0], [1], [0, 0, 1, 1], [], []>} : vector<8x256xbf16>, vector<256x128xbf16>, vector<8x128xf32> -> vector<8x128xf32>
    %c0_9 = arith.constant 0 : index
    %c0_10 = arith.constant 0 : index
    %12 = vector.load %arg4[%c0_9, %c0_10] : memref<1x128xf32, #tpu.memory_space<vmem>>, vector<1x128xf32>
    %13 = vector.broadcast %12 : vector<1x128xf32> to vector<8x128xf32>
    %14 = arith.addf %11, %13 : vector<8x128xf32>
    %cst_11 = arith.constant 0.000000e+00 : f32
    %15 = vector.broadcast %cst_11 : f32 to vector<8x128xf32>
    %16 = arith.maximumf %14, %15 : vector<8x128xf32>
    %17 = arith.truncf %16 : vector<8x128xf32> to vector<8x128xbf16>
    %c0_12 = arith.constant 0 : index
    %c0_13 = arith.constant 0 : index
    %18 = vector.load %arg5[%c0_12, %c0_13] : memref<128x64xbf16, #tpu.memory_space<vmem>>, vector<128x64xbf16>
    %cst_14 = arith.constant dense<0.000000e+00> : vector<8x64xf32>
    %19 = tpu.matmul %17, %18, %cst_14 {dimension_numbers = #tpu.dot_dimension_numbers<[1], [0], [0], [1], [0, 0, 1, 1], [], []>} : vector<8x128xbf16>, vector<128x64xbf16>, vector<8x64xf32> -> vector<8x64xf32>
    %c0_15 = arith.constant 0 : index
    %c0_16 = arith.constant 0 : index
    %20 = vector.load %arg6[%c0_15, %c0_16] : memref<1x64xf32, #tpu.memory_space<vmem>>, vector<1x64xf32>
    %21 = vector.broadcast %20 : vector<1x64xf32> to vector<8x64xf32>
    %22 = arith.addf %19, %21 : vector<8x64xf32>
    %cst_17 = arith.constant 0.000000e+00 : f32
    %23 = vector.broadcast %cst_17 : f32 to vector<8x64xf32>
    %24 = arith.maximumf %22, %23 : vector<8x64xf32>
    %c0_18 = arith.constant 0 : index
    %c0_19 = arith.constant 0 : index
    %25 = vector.load %arg7[%c0_18, %c0_19] : memref<1x64xf32, #tpu.memory_space<vmem>>, vector<1x64xf32>
    %cst_20 = arith.constant dense<0.000000e+00> : vector<1x8xf32>
    %26 = tpu.matmul %25, %24, %cst_20 {dimension_numbers = #tpu.dot_dimension_numbers<[1], [1], [0], [0], [0, 0, 1, 0], [], []>} : vector<1x64xf32>, vector<8x64xf32>, vector<1x8xf32> -> vector<1x8xf32>
    %c0_21 = arith.constant 0 : index
    %c0_22 = arith.constant 0 : index
    %27 = vector.load %arg8[%c0_21, %c0_22] : memref<1x1xf32, #tpu.memory_space<vmem>>, vector<1x1xf32>
    %28 = vector.broadcast %27 : vector<1x1xf32> to vector<1x8xf32>
    %29 = arith.addf %26, %28 : vector<1x8xf32>
    %c0_23 = arith.constant 0 : index
    %c0_24 = arith.constant 0 : index
    %30 = vector.load %arg9[%c0_23, %c0_24] : memref<1x8xf32, #tpu.memory_space<vmem>>, vector<1x8xf32>
    tpu.vector_store %arg9[%c0_23, %c0_24], %29 {strides = array<i32>} : memref<1x8xf32, #tpu.memory_space<vmem>>, vector<1x8xf32>,
    return
  }
}

</mosaic_0001>

<llo_original>
// kernel: tpu_custom_call.1
$region0: #{tpu_custom_call.1}
  #allocation0 [shape = 'u32[]', space=smem, size = 0x4, offset = 0x4, fixed_abs, tag = 'smem constant byte address 0x4 - core index']
  #allocation1 [shape = 'u32[144,128]{1,0:T(1,128)}', space=vmem, size = 0x12000, scoped, tag = 'internal scratch']
  #allocation2 [shape = 'f32[1,1]{1,0:T(1,128)S(1)}', space=vmem, size = 0x200, scoped, tag = 'scoped memory for tpu_custom_call.1']
  %s0 = inlined_call_operand.vmem [shape: f32[8,32], index: 0, kind: input, shape index: {}]
  %s1 = inlined_call_operand.vmem [shape: bf16[32,256], index: 1, kind: input, shape index: {}]
  %s2 = inlined_call_operand.vmem [shape: f32[1,256], index: 2, kind: input, shape index: {}]
  %s3 = inlined_call_operand.hbm [shape: bf16[256,128], index: 3, kind: input, shape index: {}]
  %s4 = inlined_call_operand.vmem [shape: f32[1,128], index: 4, kind: input, shape index: {}]
  %s5 = inlined_call_operand.vmem [shape: bf16[128,64], index: 5, kind: input, shape index: {}]
  %s6 = inlined_call_operand.vmem [shape: f32[1,64], index: 6, kind: input, shape index: {}]
  %s7 = inlined_call_operand.vmem [shape: f32[1,64], index: 7, kind: input, shape index: {}]
  %s8 = inlined_call_operand.<no memory space> [shape: f32[1,1], index: 8, kind: input, shape index: {}]
  %s9 = inlined_call_operand.hbm [shape: f32[1,8], index: 9, kind: output, shape index: {}]
  %s10 = sld [smem:[#allocation0]]
  $region50: #{tpu_custom_call.1} parent=0
    _
  %s12 = ssub.s32 1, %s10
  %s13 = scalar_select 0, %s12, %s10
  %v14 = vstv %s8
  %15 = vst [vmem:[#allocation2] sm:$0x1] %v14
  $region1: #{tpu_custom_call.1} parent=0
    #allocation3 [shape = 'u8[65536]{0}', space=vmem, size = 0x10000, scoped, tag = 'input window, operand 3, single buffered']
    #allocation4 [shape = 's32[1]{0}', space=sflag, size = 0x4, scoped, tag = 'scoped memory for tpu_custom_call.1']
    #allocation5 [shape = 's32[1]{0}', space=sflag, size = 0x4, scoped, tag = 'scoped memory for tpu_custom_call.1']
    #allocation6 [shape = 'u8[512]{0}', space=vmem, size = 0x400, scoped, tag = 'output window, operand 0, single buffered']
    %16 = vsyncpa [#allocation4], 0
    %17 = vsyncpa [#allocation5], 0
    // Predicated region
    $region2: #{tpu_custom_call.1} parent=1 // pred_check
      _
    $region3: #{tpu_custom_call.1} parent=1 // pred_check_branch
      %19 = sbr.rel (0) target = $region5
    $region4: #{tpu_custom_call.1} parent=1 // pred_region
      _
    $region5: #{tpu_custom_call.1} parent=1 // pred_fallthru
      _
    // Predicated region
    $region6: #{tpu_custom_call.1} parent=1 // pred_check
      _
    $region7: #{tpu_custom_call.1} parent=1 // pred_check_branch
      %21 = sbr.rel (0) target = $region9
    $region8: #{tpu_custom_call.1} parent=1 // pred_region
      _
    $region9: #{tpu_custom_call.1} parent=1 // pred_fallthru
      _
    // Predicated region
    $region10: #{tpu_custom_call.1} parent=1 // pred_check
      _
    $region11: #{tpu_custom_call.1} parent=1 // pred_check_branch
      %23 = sbr.rel (0) target = $region13
    $region12: #{tpu_custom_call.1} parent=1 // pred_region
      _
    $region13: #{tpu_custom_call.1} parent=1 // pred_fallthru
      _
    // Predicated region
    $region14: #{tpu_custom_call.1} parent=1 // pred_check
      _
    $region15: #{tpu_custom_call.1} parent=1 // pred_check_branch
      %25 = sbr.rel (0) target = $region17
    $region16: #{tpu_custom_call.1} parent=1 // pred_region
      %s27 = ssub.s32 2048, 2048
      %28 = vsyncadd [#allocation4], %s27
      %s29 = sshll.u32 [#allocation3], 4
      %s30 = int_to_ptr.vmem [resolvable:$true] %s29
      %35 = dma.hbm_to_vmem [thread:$0]  %s3, 2048, %s30, [#allocation4], 64, 64, 4
    $region17: #{tpu_custom_call.1} parent=1 // pred_fallthru
      _
    // Predicated region
    $region18: #{tpu_custom_call.1} parent=1 // pred_check
      _
    $region19: #{tpu_custom_call.1} parent=1 // pred_check_branch
      %37 = sbr.rel (0) target = $region21
    $region20: #{tpu_custom_call.1} parent=1 // pred_region
      _
    $region21: #{tpu_custom_call.1} parent=1 // pred_fallthru
      _
    // Predicated region
    $region22: #{tpu_custom_call.1} parent=1 // pred_check
      _
    $region23: #{tpu_custom_call.1} parent=1 // pred_check_branch
      %39 = sbr.rel (0) target = $region25
    $region24: #{tpu_custom_call.1} parent=1 // pred_region
      _
    $region25: #{tpu_custom_call.1} parent=1 // pred_fallthru
      _
    // Predicated region
    $region26: #{tpu_custom_call.1} parent=1 // pred_check
      _
    $region27: #{tpu_custom_call.1} parent=1 // pred_check_branch
      %41 = sbr.rel (0) target = $region29
    $region28: #{tpu_custom_call.1} parent=1 // pred_region
      _
    $region29: #{tpu_custom_call.1} parent=1 // pred_fallthru
      _
    // Predicated region
    $region30: #{tpu_custom_call.1} parent=1 // pred_check
      _
    $region31: #{tpu_custom_call.1} parent=1 // pred_check_branch
      %43 = sbr.rel (0) target = $region33
    $region32: #{tpu_custom_call.1} parent=1 // pred_region
      _
    $region33: #{tpu_custom_call.1} parent=1 // pred_fallthru
      _
    // Predicated region
    $region34: #{tpu_custom_call.1} parent=1 // pred_check
      _
    $region35: #{tpu_custom_call.1} parent=1 // pred_check_branch
      %45 = sbr.rel (0) target = $region37
    $region36: #{tpu_custom_call.1} parent=1 // pred_region
      _
    $region37: #{tpu_custom_call.1} parent=1 // pred_fallthru
      _
    // Predicated region
    $region38: #{tpu_custom_call.1} parent=1 // pred_check
      _
    $region39: #{tpu_custom_call.1} parent=1 // pred_check_branch
      %47 = sbr.rel (0) target = $region41
    $region40: #{tpu_custom_call.1} parent=1 // pred_region
      %48 = dma.done [#allocation4], 2048
    $region41: #{tpu_custom_call.1} parent=1 // pred_fallthru
      _
    %v50 = vld [vmem:[%s0] sm:$0xff]
    %v51 = vpack.c.bf16 %v50, %v50
    %v52 = vld [vmem:[%s1] sm:$0xff]
    %v53 = vld [vmem:[%s1 + $0x8] sm:$0xff]
    %v54 = vld [vmem:[%s1 + $0x10] sm:$0xff]
    %v55 = vld [vmem:[%s1 + $0x18] sm:$0xff]
    %v56 = vld [vmem:[%s2] sm:$0x3]
    %v58 = vlaneseq
    %v59 = vshrl.u32 %v58, 7
    %v60 = vsub.s32 0, %v59
    %v61 = vrot.slane %v56, %v60
    %v62 = vlaneseq
    %v63 = vshrl.u32 %v62, 7
    %v64 = vsub.s32 1, %v63
    %v65 = vrot.slane %v56, %v64
    %v72 = vunpack.c.l.b16 %v52
    %v73 = vunpack.c.h.b16 %v52
    %v74 = vunpack.c.l.b16 %v53
    %v75 = vunpack.c.h.b16 %v53
    %v76 = vunpack.c.l.b16 %v54
    %v77 = vunpack.c.h.b16 %v54
    %v78 = vunpack.c.l.b16 %v55
    %v79 = vunpack.c.h.b16 %v55
    %v80 = vpack.c.b16 %v74, %v72
    %v81 = vpack.c.b16 %v75, %v73
    %v82 = vpack.c.b16 %v78, %v76
    %v83 = vpack.c.b16 %v79, %v77
    %vm88 = vcmask 261120
    %v90 = vsel %vm88, %v51, 0
    %92 = vmatprep.subr.bf16.mxu0 0
    %93 = vmatpush1.bf16.msra.mxu0 0
    %94 = vmatprep.subr.bf16.mxu0 0
    %95 = vmatpush1.bf16.msra.mxu0 0
    %96 = vmatprep.subr.bf16.mxu0 0
    %97 = vmatpush1.bf16.msra.mxu0 0
    %98 = vmatprep.subr.bf16.mxu0 0
    %99 = vmatpush1.bf16.msra.mxu0 0
    %100 = vmatprep.subr.bf16.mxu0 0
    %101 = vmatpush1.bf16.msra.mxu0 0
    %102 = vmatprep.subr.bf16.mxu0 0
    %103 = vmatpush1.bf16.msra.mxu0 0
    %104 = vmatprep.subr.bf16.mxu0 %v83
    %105 = vmatpush1.bf16.msra.mxu0 %v82
    %106 = vmatprep.subr.bf16.mxu0 %v81
    %107 = vmatpush1.bf16.msra.mxu0 %v80
    %108 = vmatprep.subr.bf16.mxu0 0
    %109 = vmatpush2.bf16.msra.mxu0 0
    %110 = vmatprep.subr.bf16.mxu0 0
    %111 = vmatpush2.bf16.msra.mxu0 0
    %112 = vmatprep.subr.bf16.mxu0 0
    %113 = vmatpush2.bf16.msra.mxu0 0
    %114 = vmatprep.subr.bf16.mxu0 0
    %115 = vmatpush2.bf16.msra.mxu0 0
    %116 = vmatprep.subr.bf16.mxu0 0
    %117 = vmatpush2.bf16.msra.mxu0 0
    %118 = vmatprep.subr.bf16.mxu0 0
    %119 = vmatpush2.bf16.msra.mxu0 0
    %120 = vmatprep.subr.bf16.mxu0 0
    %121 = vmatpush2.bf16.msra.mxu0 0
    %122 = vmatprep.subr.bf16.mxu0 0
    %123 = vmatpush2.bf16.msra.mxu0 0
    %124 = vmatprep.mubr.bf16.mxu0 0
    %125 = vmatmul.mubr.bf16.gmra.mxu0 %v90
    %v126 = vpop.f32.mrf.mxu0
    %v127 = vadd.f32 %v61, %v126
    %v128 = vpop.f32.mrf.mxu0
    %v129 = vadd.f32 %v65, %v128
    %v130 = vpop.f32.mrf.mxu0
    %v131 = vpop.f32.mrf.mxu0
    %132 = vdwg.mxu0
    %v133 = vmax.f32 %v127, 0.0
    %v134 = vmax.f32 %v129, 0.0
    %v135 = vpack.c.bf16 %v133, %v133
    %v136 = vpack.c.bf16 %v134, %v134
    %v137 = vld [vmem:[#allocation3] sm:$0xf]
    %v138 = vld [vmem:[#allocation3 + $0x4] sm:$0xf]
    %v139 = vld [vmem:[#allocation3 + $0x8] sm:$0xf]
    %v140 = vld [vmem:[#allocation3 + $0xc] sm:$0xf]
    %v141 = vld [vmem:[#allocation3 + $0x10] sm:$0xf]
    %v142 = vld [vmem:[#allocation3 + $0x14] sm:$0xf]
    %v143 = vld [vmem:[#allocation3 + $0x18] sm:$0xf]
    %v144 = vld [vmem:[#allocation3 + $0x1c] sm:$0xf]
    %v145 = vld [vmem:[#allocation3 + $0x20] sm:$0xf]
    %v146 = vld [vmem:[#allocation3 + $0x24] sm:$0xf]
    %v147 = vld [vmem:[#allocation3 + $0x28] sm:$0xf]
    %v148 = vld [vmem:[#allocation3 + $0x2c] sm:$0xf]
    %v149 = vld [vmem:[#allocation3 + $0x30] sm:$0xf]
    %v150 = vld [vmem:[#allocation3 + $0x34] sm:$0xf]
    %v151 = vld [vmem:[#allocation3 + $0x38] sm:$0xf]
    %v152 = vld [vmem:[#allocation3 + $0x3c] sm:$0xf]
    %v153 = vld [vmem:[#allocation3 + $0x40] sm:$0xf]
    %v154 = vld [vmem:[#allocation3 + $0x44] sm:$0xf]
    %v155 = vld [vmem:[#allocation3 + $0x48] sm:$0xf]
    %v156 = vld [vmem:[#allocation3 + $0x4c] sm:$0xf]
    %v157 = vld [vmem:[#allocation3 + $0x50] sm:$0xf]
    %v158 = vld [vmem:[#allocation3 + $0x54] sm:$0xf]
    %v159 = vld [vmem:[#allocation3 + $0x58] sm:$0xf]
    %v160 = vld [vmem:[#allocation3 + $0x5c] sm:$0xf]
    %v161 = vld [vmem:[#allocation3 + $0x60] sm:$0xf]
    %v162 = vld [vmem:[#allocation3 + $0x64] sm:$0xf]
    %v163 = vld [vmem:[#allocation3 + $0x68] sm:$0xf]
    %v164 = vld [vmem:[#allocation3 + $0x6c] sm:$0xf]
    %v165 = vld [vmem:[#allocation3 + $0x70] sm:$0xf]
    %v166 = vld [vmem:[#allocation3 + $0x74] sm:$0xf]
    %v167 = vld [vmem:[#allocation3 + $0x78] sm:$0xf]
    %v168 = vld [vmem:[#allocation3 + $0x7c] sm:$0xf]
    %v169 = vld [vmem:[%s4] sm:$0x1]
    %v171 = vlaneseq
    %v172 = vshrl.u32 %v171, 7
    %v173 = vsub.s32 0, %v172
    %v174 = vrot.slane %v169, %v173
    %v208 = vunpack.c.l.b16 %v137
    %v209 = vunpack.c.l.b16 %v138
    %v210 = vunpack.c.l.b16 %v139
    %v211 = vunpack.c.l.b16 %v140
    %v212 = vunpack.c.l.b16 %v141
    %v213 = vunpack.c.l.b16 %v142
    %v214 = vunpack.c.l.b16 %v143
    %v215 = vunpack.c.l.b16 %v144
    %v216 = vunpack.c.l.b16 %v145
    %v217 = vunpack.c.l.b16 %v146
    %v218 = vunpack.c.l.b16 %v147
    %v219 = vunpack.c.l.b16 %v148
    %v220 = vunpack.c.l.b16 %v149
    %v221 = vunpack.c.l.b16 %v150
    %v222 = vunpack.c.l.b16 %v151
    %v223 = vunpack.c.l.b16 %v152
    %v224 = vunpack.c.l.b16 %v153
    %v225 = vunpack.c.l.b16 %v154
    %v226 = vunpack.c.l.b16 %v155
    %v227 = vunpack.c.l.b16 %v156
    %v228 = vunpack.c.l.b16 %v157
    %v229 = vunpack.c.l.b16 %v158
    %v230 = vunpack.c.l.b16 %v159
    %v231 = vunpack.c.l.b16 %v160
    %v232 = vunpack.c.l.b16 %v161
    %v233 = vunpack.c.l.b16 %v162
    %v234 = vunpack.c.l.b16 %v163
    %v235 = vunpack.c.l.b16 %v164
    %v236 = vunpack.c.l.b16 %v165
    %v237 = vunpack.c.l.b16 %v166
    %v238 = vunpack.c.l.b16 %v167
    %v239 = vunpack.c.l.b16 %v168
    %v240 = vpack.c.b16 %v209, %v208
    %v241 = vpack.c.b16 %v211, %v210
    %v242 = vpack.c.b16 %v213, %v212
    %v243 = vpack.c.b16 %v215, %v214
    %v244 = vpack.c.b16 %v217, %v216
    %v245 = vpack.c.b16 %v219, %v218
    %v246 = vpack.c.b16 %v221, %v220
    %v247 = vpack.c.b16 %v223, %v222
    %v248 = vpack.c.b16 %v225, %v224
    %v249 = vpack.c.b16 %v227, %v226
    %v250 = vpack.c.b16 %v229, %v228
    %v251 = vpack.c.b16 %v231, %v230
    %v252 = vpack.c.b16 %v233, %v232
    %v253 = vpack.c.b16 %v235, %v234
    %v254 = vpack.c.b16 %v237, %v236
    %v255 = vpack.c.b16 %v239, %v238
    %272 = vmatprep.subr.bf16.mxu0 0
    %273 = vmatpush1.bf16.msra.mxu0 %v247
    %274 = vmatprep.subr.bf16.mxu0 0
    %275 = vmatpush1.bf16.msra.mxu0 %v246
    %276 = vmatprep.subr.bf16.mxu0 0
    %277 = vmatpush1.bf16.msra.mxu0 %v245
    %278 = vmatprep.subr.bf16.mxu0 0
    %279 = vmatpush1.bf16.msra.mxu0 %v244
    %280 = vmatprep.subr.bf16.mxu0 0
    %281 = vmatpush1.bf16.msra.mxu0 %v243
    %282 = vmatprep.subr.bf16.mxu0 0
    %283 = vmatpush1.bf16.msra.mxu0 %v242
    %284 = vmatprep.subr.bf16.mxu0 0
    %285 = vmatpush1.bf16.msra.mxu0 %v241
    %286 = vmatprep.subr.bf16.mxu0 0
    %287 = vmatpush1.bf16.msra.mxu0 %v240
    %288 = vmatprep.subr.bf16.mxu0 0
    %289 = vmatpush2.bf16.msra.mxu0 %v255
    %290 = vmatprep.subr.bf16.mxu0 0
    %291 = vmatpush2.bf16.msra.mxu0 %v254
    %292 = vmatprep.subr.bf16.mxu0 0
    %293 = vmatpush2.bf16.msra.mxu0 %v253
    %294 = vmatprep.subr.bf16.mxu0 0
    %295 = vmatpush2.bf16.msra.mxu0 %v252
    %296 = vmatprep.subr.bf16.mxu0 0
    %297 = vmatpush2.bf16.msra.mxu0 %v251
    %298 = vmatprep.subr.bf16.mxu0 0
    %299 = vmatpush2.bf16.msra.mxu0 %v250
    %300 = vmatprep.subr.bf16.mxu0 0
    %301 = vmatpush2.bf16.msra.mxu0 %v249
    %302 = vmatprep.subr.bf16.mxu0 0
    %303 = vmatpush2.bf16.msra.mxu0 %v248
    %304 = vmatprep.mubr.bf16.mxu0 %v136
    %305 = vmatmul.mubr.bf16.gmra.mxu0 %v135
    %v306 = vpop.f32.mrf.mxu0
    %v307 = vadd.f32 %v174, %v306
    %v308 = vpop.f32.mrf.mxu0
    %v309 = vpop.f32.mrf.mxu0
    %v310 = vpop.f32.mrf.mxu0
    %311 = vdwg.mxu0
    %v312 = vmax.f32 %v307, 0.0
    %v313 = vpack.c.bf16 %v312, %v312
    %v314 = vld [vmem:[%s5] sm:$0xf]
    %v315 = vld [vmem:[%s5 + $0x4] sm:$0xf]
    %v316 = vld [vmem:[%s5 + $0x8] sm:$0xf]
    %v317 = vld [vmem:[%s5 + $0xc] sm:$0xf]
    %v318 = vld [vmem:[%s5 + $0x10] sm:$0xf]
    %v319 = vld [vmem:[%s5 + $0x14] sm:$0xf]
    %v320 = vld [vmem:[%s5 + $0x18] sm:$0xf]
    %v321 = vld [vmem:[%s5 + $0x1c] sm:$0xf]
    %v322 = vld [vmem:[%s5 + $0x20] sm:$0xf]
    %v323 = vld [vmem:[%s5 + $0x24] sm:$0xf]
    %v324 = vld [vmem:[%s5 + $0x28] sm:$0xf]
    %v325 = vld [vmem:[%s5 + $0x2c] sm:$0xf]
    %v326 = vld [vmem:[%s5 + $0x30] sm:$0xf]
    %v327 = vld [vmem:[%s5 + $0x34] sm:$0xf]
    %v328 = vld [vmem:[%s5 + $0x38] sm:$0xf]
    %v329 = vld [vmem:[%s5 + $0x3c] sm:$0xf]
    %v330 = vld [vmem:[%s6] sm:$0x1]
    %v332 = vlaneseq
    %v333 = vshrl.u32 %v332, 7
    %v334 = vsub.s32 0, %v333
    %v335 = vrot.slane %v330, %v334
    %v353 = vunpack.c.l.b16 %v314
    %v354 = vunpack.c.l.b16 %v315
    %v355 = vunpack.c.l.b16 %v316
    %v356 = vunpack.c.l.b16 %v317
    %v357 = vunpack.c.l.b16 %v318
    %v358 = vunpack.c.l.b16 %v319
    %v359 = vunpack.c.l.b16 %v320
    %v360 = vunpack.c.l.b16 %v321
    %v361 = vunpack.c.l.b16 %v322
    %v362 = vunpack.c.l.b16 %v323
    %v363 = vunpack.c.l.b16 %v324
    %v364 = vunpack.c.l.b16 %v325
    %v365 = vunpack.c.l.b16 %v326
    %v366 = vunpack.c.l.b16 %v327
    %v367 = vunpack.c.l.b16 %v328
    %v368 = vunpack.c.l.b16 %v329
    %v369 = vpack.c.b16 %v354, %v353
    %v370 = vpack.c.b16 %v356, %v355
    %v371 = vpack.c.b16 %v358, %v357
    %v372 = vpack.c.b16 %v360, %v359
    %v373 = vpack.c.b16 %v362, %v361
    %v374 = vpack.c.b16 %v364, %v363
    %v375 = vpack.c.b16 %v366, %v365
    %v376 = vpack.c.b16 %v368, %v367
    %385 = vmatprep.subr.bf16.mxu0 0
    %386 = vmatpush1.bf16.msra.mxu0 %v376
    %387 = vmatprep.subr.bf16.mxu0 0
    %388 = vmatpush1.bf16.msra.mxu0 %v375
    %389 = vmatprep.subr.bf16.mxu0 0
    %390 = vmatpush1.bf16.msra.mxu0 %v374
    %391 = vmatprep.subr.bf16.mxu0 0
    %392 = vmatpush1.bf16.msra.mxu0 %v373
    %393 = vmatprep.subr.bf16.mxu0 0
    %394 = vmatpush1.bf16.msra.mxu0 %v372
    %395 = vmatprep.subr.bf16.mxu0 0
    %396 = vmatpush1.bf16.msra.mxu0 %v371
    %397 = vmatprep.subr.bf16.mxu0 0
    %398 = vmatpush1.bf16.msra.mxu0 %v370
    %399 = vmatprep.subr.bf16.mxu0 0
    %400 = vmatpush1.bf16.msra.mxu0 %v369
    %401 = vmatprep.subr.bf16.mxu0 0
    %402 = vmatpush2.bf16.msra.mxu0 0
    %403 = vmatprep.subr.bf16.mxu0 0
    %404 = vmatpush2.bf16.msra.mxu0 0
    %405 = vmatprep.subr.bf16.mxu0 0
    %406 = vmatpush2.bf16.msra.mxu0 0
    %407 = vmatprep.subr.bf16.mxu0 0
    %408 = vmatpush2.bf16.msra.mxu0 0
    %409 = vmatprep.subr.bf16.mxu0 0
    %410 = vmatpush2.bf16.msra.mxu0 0
    %411 = vmatprep.subr.bf16.mxu0 0
    %412 = vmatpush2.bf16.msra.mxu0 0
    %413 = vmatprep.subr.bf16.mxu0 0
    %414 = vmatpush2.bf16.msra.mxu0 0
    %415 = vmatprep.subr.bf16.mxu0 0
    %416 = vmatpush2.bf16.msra.mxu0 0
    %417 = vmatprep.mubr.bf16.mxu0 0
    %418 = vmatmul.mubr.bf16.gmra.mxu0 %v313
    %v419 = vpop.f32.mrf.mxu0
    %v420 = vadd.f32 %v335, %v419
    %v421 = vpop.f32.mrf.mxu0
    %v422 = vpop.f32.mrf.mxu0
    %v423 = vpop.f32.mrf.mxu0
    %424 = vdwg.mxu0
    %v425 = vmax.f32 %v420, 0.0
    %v426 = vld [vmem:[%s7] sm:$0x1]
    %v427 = vld [vmem:[#allocation2] sm:$0x1]
    %429 = vset.pattern.permute.xlu0 0
    %430 = vperm.xlu0 %429, %v427
    %v431 = vpop.permute.xlu0 %430
    %v433 = vlaneseq
    %v434 = vshrl.u32 %v433, 7
    %v435 = vsub.s32 0, %v434
    %v436 = vrot.slane %v431, %v435
    %vm437 = vcmask 523264
    %v439 = vsel %vm437, %v426, 0
    %v442 = vsel %vm437, %v425, 0
    %444 = vmatprep.subr.mxu0 0.0
    %445 = vmatpush1.xpose.msra.mxu0 0.0
    %446 = vmatprep.subr.mxu0 0.0
    %447 = vmatpush1.xpose.msra.mxu0 0.0
    %448 = vmatprep.subr.mxu0 0.0
    %449 = vmatpush1.xpose.msra.mxu0 0.0
    %450 = vmatprep.subr.mxu0 0.0
    %451 = vmatpush1.xpose.msra.mxu0 0.0
    %452 = vmatprep.subr.mxu0 0.0
    %453 = vmatpush1.xpose.msra.mxu0 0.0
    %454 = vmatprep.subr.mxu0 0.0
    %455 = vmatpush1.xpose.msra.mxu0 0.0
    %456 = vmatprep.subr.mxu0 0.0
    %457 = vmatpush1.xpose.msra.mxu0 0.0
    %458 = vmatprep.subr.mxu0 0.0
    %459 = vmatpush1.xpose.msra.mxu0 0.0
    %460 = vmatprep.subr.mxu0 0.0
    %461 = vmatpush1.xpose.msra.mxu0 0.0
    %462 = vmatprep.subr.mxu0 0.0
    %463 = vmatpush1.xpose.msra.mxu0 0.0
    %464 = vmatprep.subr.mxu0 0.0
    %465 = vmatpush1.xpose.msra.mxu0 0.0
    %466 = vmatprep.subr.mxu0 0.0
    %467 = vmatpush1.xpose.msra.mxu0 0.0
    %468 = vmatprep.subr.mxu0 0.0
    %469 = vmatpush1.xpose.msra.mxu0 0.0
    %470 = vmatprep.subr.mxu0 0.0
    %471 = vmatpush1.xpose.msra.mxu0 0.0
    %472 = vmatprep.subr.mxu0 0.0
    %473 = vmatpush1.xpose.msra.mxu0 0.0
    %474 = vmatprep.subr.mxu0 0.0
    %475 = vmatpush1.xpose.msra.mxu0 %v442
    %476 = vmatprep.subr.mxu0 0.0
    %477 = vmatpush2.xpose.msra.mxu0 0.0
    %478 = vmatprep.subr.mxu0 0.0
    %479 = vmatpush2.xpose.msra.mxu0 0.0
    %480 = vmatprep.subr.mxu0 0.0
    %481 = vmatpush2.xpose.msra.mxu0 0.0
    %482 = vmatprep.subr.mxu0 0.0
    %483 = vmatpush2.xpose.msra.mxu0 0.0
    %484 = vmatprep.subr.mxu0 0.0
    %485 = vmatpush2.xpose.msra.mxu0 0.0
    %486 = vmatprep.subr.mxu0 0.0
    %487 = vmatpush2.xpose.msra.mxu0 0.0
    %488 = vmatprep.subr.mxu0 0.0
    %489 = vmatpush2.xpose.msra.mxu0 0.0
    %490 = vmatprep.subr.mxu0 0.0
    %491 = vmatpush2.xpose.msra.mxu0 0.0
    %492 = vmatprep.subr.mxu0 0.0
    %493 = vmatpush2.xpose.msra.mxu0 0.0
    %494 = vmatprep.subr.mxu0 0.0
    %495 = vmatpush2.xpose.msra.mxu0 0.0
    %496 = vmatprep.subr.mxu0 0.0
    %497 = vmatpush2.xpose.msra.mxu0 0.0
    %498 = vmatprep.subr.mxu0 0.0
    %499 = vmatpush2.xpose.msra.mxu0 0.0
    %500 = vmatprep.subr.mxu0 0.0
    %501 = vmatpush2.xpose.msra.mxu0 0.0
    %502 = vmatprep.subr.mxu0 0.0
    %503 = vmatpush2.xpose.msra.mxu0 0.0
    %504 = vmatprep.subr.mxu0 0.0
    %505 = vmatpush2.xpose.msra.mxu0 0.0
    %506 = vmatprep.subr.mxu0 0.0
    %507 = vmatpush2.xpose.msra.mxu0 0.0
    %508 = vmatprep.mubr.f32.mxu0 0.0
    %509 = vmatmul.mubr.f32.gmra.mxu0 %v439
    %v510 = vpop.f32.mrf.mxu0
    %v511 = vadd.f32 %v436, %v510
    %v512 = vpop.f32.mrf.mxu0
    %513 = vdwg.mxu0
    %vm514 = vcmask 57344
    %515 = vst.msk [vmem:[#allocation6] sm:$0x1] %vm514, %v511
    // Predicated region
    $region42: #{tpu_custom_call.1} parent=1 // pred_check
      _
    $region43: #{tpu_custom_call.1} parent=1 // pred_check_branch
      %517 = sbr.rel (0) target = $region45
    $region44: #{tpu_custom_call.1} parent=1 // pred_region
      %s519 = ssub.s32 16, 16
      %520 = vsyncadd [#allocation5], %s519
      %s522 = sshll.u32 [#allocation6], 4
      %s523 = int_to_ptr.vmem [resolvable:$true] %s522
      %525 = dma.vmem_to_hbm [thread:$0]  %s523, 16, %s9, [#allocation5]
    $region45: #{tpu_custom_call.1} parent=1 // pred_fallthru
      _
    // Predicated region
    $region46: #{tpu_custom_call.1} parent=1 // pred_check
      _
    $region47: #{tpu_custom_call.1} parent=1 // pred_check_branch
      %527 = sbr.rel (0) target = $region49
    $region48: #{tpu_custom_call.1} parent=1 // pred_region
      %528 = dma.done [#allocation5], 16
    $region49: #{tpu_custom_call.1} parent=1 // pred_fallthru
      _
    %529 = vsyncpa [#allocation4], 1
    %530 = vsyncpa [#allocation5], 1

</llo_original>
